<compile_context>
chip_gen: v5e
topology: v5e:2x2
jax: 0.10.0
libtpu: 0.0.40
codegen_flags: <defaults>
</compile_context>

<pallas_src>
import functools

import jax
import jax.numpy as jnp
from jax.experimental import pallas as pl
from jax.experimental.pallas import tpu as pltpu

EPS = 1e-12

_BLOCK_ELEM_BUDGET = 1 << 20          # elements per input block (~4 MiB at f32)
_VMEM_LIMIT_BYTES = 48 * 1024 * 1024  # scoped VMEM limit (safe v5e/v6e/v7x)


def _round_up(a, b):
    return ((a + b - 1) // b) * b


def _finalize(dot, tpow, xpow, eps):
    """Closed-form SI-SDR from the three row reductions (f32)."""
    alpha = dot / (tpow + eps)
    num = alpha * alpha * tpow                          # == sum((alpha*t)^2)
    den = num - 2.0 * alpha * dot + xpow                # == sum((alpha*t - x)^2)
    den = jnp.maximum(den, 0.0)                         # guard f32 cancellation
    return -10.0 * jnp.log10((num + eps) / (den + eps))


def _neg_sisdr_single_kernel(x_ref, t_ref, o_ref, *, eps):
    """Whole T axis in one block: no scratch, no masking, direct write."""
    x = x_ref[...].astype(jnp.float32)
    t = t_ref[...].astype(jnp.float32)
    dot = jnp.sum(x * t, axis=-1, keepdims=True)
    tpow = jnp.sum(t * t, axis=-1, keepdims=True)
    xpow = jnp.sum(x * x, axis=-1, keepdims=True)
    o_ref[...] = _finalize(dot, tpow, xpow, eps)


def _neg_sisdr_multi_kernel(x_ref, t_ref, o_ref, dot_acc, tpow_acc, xpow_acc, *,
                            eps, t_total, tile_t, mask_t):
    """Streaming reduction over K tiles of T; mask only on the last tile."""
    k = pl.program_id(1)
    last = pl.num_programs(1) - 1

    @pl.when(k == 0)
    def _():
        dot_acc[...] = jnp.zeros_like(dot_acc)
        tpow_acc[...] = jnp.zeros_like(tpow_acc)
        xpow_acc[...] = jnp.zeros_like(xpow_acc)

    x = x_ref[...].astype(jnp.float32)
    t = t_ref[...].astype(jnp.float32)

    def accumulate(xv, tv):
        dot_acc[...] += jnp.sum(xv * tv, axis=-1, keepdims=True)
        tpow_acc[...] += jnp.sum(tv * tv, axis=-1, keepdims=True)
        xpow_acc[...] += jnp.sum(xv * xv, axis=-1, keepdims=True)

    if mask_t:
        # Hot path: all but the last K tile are full -> no mask work.
        @pl.when(k < last)
        def _():
            accumulate(x, t)

        # Last (ragged) tile: zero out-of-bounds lanes.
        # NOTE: k*tile_t + lane is int32; fine for any realistic T (< 2^31).
        @pl.when(k == last)
        def _():
            lane = jax.lax.broadcasted_iota(jnp.int32, x.shape, 1)
            valid = (k * tile_t + lane) < t_total
            accumulate(jnp.where(valid, x, 0.0), jnp.where(valid, t, 0.0))
    else:
        accumulate(x, t)

    @pl.when(k == last)
    def _():
        o_ref[...] = _finalize(dot_acc[...], tpow_acc[...], xpow_acc[...], eps)


def neg_sisdr(inp, target, batch_mean=True, eps=EPS, input_dtype=None,
              block_elem_budget=_BLOCK_ELEM_BUDGET):
    """JAX/Pallas equivalent of NegSISDR.forward.

    Args:
        inp, target: (B, T) or (B, C, T).
        batch_mean: mean over batch if True.
        input_dtype: optional dtype to cast inputs to before the kernel
            (e.g. jnp.bfloat16 to halve HBM traffic; accumulation stays f32).
        block_elem_budget: elements per input block (testing knob).
    Returns:
        scalar if batch_mean else (B,).
    """
    n_dim = inp.ndim
    assert n_dim in (2, 3), f"Only 2D or 3D tensor is acceptable, got {n_dim}D."
    assert inp.shape == target.shape

    if n_dim == 3:
        B, C, T = inp.shape
        R = B * C
    else:
        B, T = inp.shape
        C = None
        R = B

    x = inp.reshape(R, T)
    t = target.reshape(R, T)
    if input_dtype is not None:
        x = x.astype(input_dtype)
        t = t.astype(input_dtype)

    # --- adaptive tile sizes ------------------------------------------------
    T_pad = _round_up(T, 128)
    row_cap = _round_up(R, 8)
    if R >= 16:
        # Guarantee >= 2 row blocks so the "parallel" row axis can be sharded
        # across both v7x TensorCores (no-op on single-TC v5e/v6e).
        row_cap = min(row_cap, _round_up((R + 1) // 2, 8))
    # TODO(synk): for R < 16 with very long T, a 2-way parallel split of the T
    # axis (partial dot/tpow/xpow combined in JAX) could feed both v7x cores.

    single_k = T_pad <= max(block_elem_budget // 8, 128)
    if single_k:
        # Whole T per block: lane dim equals the full array dim (no masking);
        # grow rows to fill the block budget.
        tile_t = T
        tile_rows = min(row_cap, max(8, (block_elem_budget // T_pad) // 8 * 8))
        k_tiles = 1
        mask_t = False
    else:
        # Very long T: minimum row tile, fill the budget with lanes.
        tile_rows = 8
        tile_t = max(128, (block_elem_budget // tile_rows) // 128 * 128)
        k_tiles = pl.cdiv(T, tile_t)
        mask_t = (T % tile_t) != 0

    row_tiles = pl.cdiv(R, tile_rows)
    out_shape = jax.ShapeDtypeStruct((row_tiles * tile_rows, 1), jnp.float32)

    if single_k:
        kernel = functools.partial(_neg_sisdr_single_kernel, eps=float(eps))
        per_row = pl.pallas_call(
            kernel,
            out_shape=out_shape,
            grid=(row_tiles,),
            in_specs=[
                pl.BlockSpec((tile_rows, tile_t), lambda i: (i, 0)),
                pl.BlockSpec((tile_rows, tile_t), lambda i: (i, 0)),
            ],
            out_specs=pl.BlockSpec((tile_rows, 1), lambda i: (i, 0)),
            compiler_params=pltpu.CompilerParams(
                dimension_semantics=("parallel",),
                vmem_limit_bytes=_VMEM_LIMIT_BYTES,
            ),
        )(x, t)
    else:
        kernel = functools.partial(
            _neg_sisdr_multi_kernel,
            eps=float(eps), t_total=T, tile_t=tile_t, mask_t=mask_t,
        )
        per_row = pl.pallas_call(
            kernel,
            out_shape=out_shape,
            grid=(row_tiles, k_tiles),
            in_specs=[
                pl.BlockSpec((tile_rows, tile_t), lambda i, k: (i, k)),
                pl.BlockSpec((tile_rows, tile_t), lambda i, k: (i, k)),
            ],
            out_specs=pl.BlockSpec((tile_rows, 1), lambda i, k: (i, 0)),
            scratch_shapes=[
                pltpu.VMEM((tile_rows, 1), jnp.float32),   # dot accumulator
                pltpu.VMEM((tile_rows, 1), jnp.float32),   # ||t||^2 accumulator
                pltpu.VMEM((tile_rows, 1), jnp.float32),   # ||x||^2 accumulator
            ],
            compiler_params=pltpu.CompilerParams(
                dimension_semantics=("parallel", "arbitrary"),
                vmem_limit_bytes=_VMEM_LIMIT_BYTES,
            ),
        )(x, t)

    # Rows beyond R (ragged last row tile) hold garbage and are discarded here.
    loss = per_row[:R, 0]

    if n_dim == 3:
        loss = loss.reshape(B, C).mean(axis=1)  # mean over channels
    if batch_mean:
        loss = loss.mean(axis=0)
    return loss


def _neg_sisdr_ref(inp, target, batch_mean=True, eps=EPS):
    """Pure-JAX reference mirroring the PyTorch code."""
    n_dim = inp.ndim
    alpha = jnp.sum(inp * target, axis=n_dim - 1, keepdims=True) / (
        jnp.sum(target ** 2, axis=n_dim - 1, keepdims=True) + eps
    )
    loss = (jnp.sum((alpha * target) ** 2, axis=n_dim - 1) + eps) / (
        jnp.sum((alpha * target - inp) ** 2, axis=n_dim - 1) + eps
    )
    loss = -10.0 * jnp.log10(loss)
    if n_dim == 3:
        loss = loss.mean(axis=1)
    if batch_mean:
        loss = loss.mean(axis=0)
    return loss


if __name__ == "__main__":
    key = jax.random.PRNGKey(0)
    k1, k2 = jax.random.split(key)

    # 3D path (single-K specialized kernel).
    B, C, T = 2, 4, 128
    inp = jax.random.normal(k1, (B, C, T), dtype=jnp.float32)
    target = jax.random.normal(k2, (B, C, T), dtype=jnp.float32)

    out = jax.block_until_ready(neg_sisdr(inp, target, batch_mean=True))
    ref = _neg_sisdr_ref(inp, target, batch_mean=True)
    assert jnp.allclose(out, ref, rtol=1e-4, atol=1e-4), (out, ref)

    # 2D path.
    out2 = jax.block_until_ready(neg_sisdr(inp[:, 0, :], target[:, 0, :]))
    ref2 = _neg_sisdr_ref(inp[:, 0, :], target[:, 0, :])
    assert jnp.allclose(out2, ref2, rtol=1e-4, atol=1e-4), (out2, ref2)

    # Ragged shapes: rows not a multiple of 8, T not a multiple of 128.
    # Single-K path uses tile_t == T so no lane masking is needed at all.
    k3, k4 = jax.random.split(k2)
    B3, C3, T3 = 3, 2, 200
    inp3 = jax.random.normal(k3, (B3, C3, T3), dtype=jnp.float32)
    tgt3 = jax.random.normal(k4, (B3, C3, T3), dtype=jnp.float32)
    out3 = jax.block_until_ready(neg_sisdr(inp3, tgt3, batch_mean=False))
    ref3 = _neg_sisdr_ref(inp3, tgt3, batch_mean=False)
    assert jnp.allclose(out3, ref3, rtol=1e-4, atol=1e-4), (out3, ref3)

    # Multi-K streaming path with ragged last tile (force with a tiny budget):
    # T=200, tile_t=128 -> 2 K tiles, mask only on the last tile.
    out4 = jax.block_until_ready(
        neg_sisdr(inp3, tgt3, batch_mean=False, block_elem_budget=1024))
    assert jnp.allclose(out4, ref3, rtol=1e-4, atol=1e-4), (out4, ref3)

    # Multi-K path without masking (T multiple of tile_t).
    out5 = jax.block_until_ready(
        neg_sisdr(inp, target, batch_mean=True, block_elem_budget=512))
    assert jnp.allclose(out5, ref, rtol=1e-4, atol=1e-4), (out5, ref)

    # bf16-input path (halves HBM traffic; f32 accumulation in-kernel).
    # Compare against the f32 reference applied to the bf16-rounded inputs.
    inp_bf = inp.astype(jnp.bfloat16).astype(jnp.float32)
    tgt_bf = target.astype(jnp.bfloat16).astype(jnp.float32)
    out6 = jax.block_until_ready(
        neg_sisdr(inp, target, batch_mean=True, input_dtype=jnp.bfloat16))
    ref6 = _neg_sisdr_ref(inp_bf, tgt_bf, batch_mean=True)
    assert jnp.allclose(out6, ref6, rtol=1e-3, atol=1e-3), (out6, ref6)

    print("KERNEL_OK")
</pallas_src>

<mosaic_0001>
module attributes {stable_mosaic.version = 11 : i64} {
  func.func @_neg_sisdr_single_kernel(%arg0: i32, %arg1: memref<8x128xf32, #tpu.memory_space<vmem>>, %arg2: memref<8x128xf32, #tpu.memory_space<vmem>>, %arg3: memref<8x1xf32, #tpu.memory_space<vmem>>) attributes {dimension_semantics = [#tpu.dimension_semantics<parallel>], iteration_bounds = array<i64: 1>, scalar_prefetch = 0 : i64, scratch_operands = 0 : i64, tpu.core_type = #tpu.core_type<tc>, window_params = [{transform_indices = @transform_0, window_bounds = array<i64: 8, 128>}, {transform_indices = @transform_1, window_bounds = array<i64: 8, 128>}, {transform_indices = @transform_2, window_bounds = array<i64: 8, 1>}]} {
    %c0 = arith.constant 0 : index
    %c0_0 = arith.constant 0 : index
    %0 = vector.load %arg1[%c0, %c0_0] : memref<8x128xf32, #tpu.memory_space<vmem>>, vector<8x128xf32>
    %c0_1 = arith.constant 0 : index
    %c0_2 = arith.constant 0 : index
    %1 = vector.load %arg2[%c0_1, %c0_2] : memref<8x128xf32, #tpu.memory_space<vmem>>, vector<8x128xf32>
    %2 = arith.mulf %0, %1 : vector<8x128xf32>
    %cst = arith.constant dense<0.000000e+00> : vector<8xf32>
    %3 = vector.multi_reduction <add>, %2, %cst [1] : vector<8x128xf32> to vector<8xf32>
    %4 = vector.shape_cast %3 : vector<8xf32> to vector<8x1xf32>
    %5 = arith.mulf %1, %1 : vector<8x128xf32>
    %cst_3 = arith.constant dense<0.000000e+00> : vector<8xf32>
    %6 = vector.multi_reduction <add>, %5, %cst_3 [1] : vector<8x128xf32> to vector<8xf32>
    %7 = vector.shape_cast %6 : vector<8xf32> to vector<8x1xf32>
    %8 = arith.mulf %0, %0 : vector<8x128xf32>
    %cst_4 = arith.constant dense<0.000000e+00> : vector<8xf32>
    %9 = vector.multi_reduction <add>, %8, %cst_4 [1] : vector<8x128xf32> to vector<8xf32>
    %10 = vector.shape_cast %9 : vector<8xf32> to vector<8x1xf32>
    %cst_5 = arith.constant 9.99999996E-13 : f32
    %11 = vector.broadcast %cst_5 : f32 to vector<8x1xf32>
    %12 = arith.addf %7, %11 : vector<8x1xf32>
    %13 = arith.divf %4, %12 : vector<8x1xf32>
    %14 = arith.mulf %13, %13 : vector<8x1xf32>
    %15 = arith.mulf %14, %7 : vector<8x1xf32>
    %cst_6 = arith.constant 2.000000e+00 : f32
    %16 = vector.broadcast %cst_6 : f32 to vector<8x1xf32>
    %17 = arith.mulf %16, %13 : vector<8x1xf32>
    %18 = arith.mulf %17, %4 : vector<8x1xf32>
    %19 = arith.subf %15, %18 : vector<8x1xf32>
    %20 = arith.addf %19, %10 : vector<8x1xf32>
    %cst_7 = arith.constant 0.000000e+00 : f32
    %21 = vector.broadcast %cst_7 : f32 to vector<8x1xf32>
    %22 = arith.maximumf %20, %21 : vector<8x1xf32>
    %cst_8 = arith.constant 9.99999996E-13 : f32
    %23 = vector.broadcast %cst_8 : f32 to vector<8x1xf32>
    %24 = arith.addf %15, %23 : vector<8x1xf32>
    %cst_9 = arith.constant 9.99999996E-13 : f32
    %25 = vector.broadcast %cst_9 : f32 to vector<8x1xf32>
    %26 = arith.addf %22, %25 : vector<8x1xf32>
    %27 = arith.divf %24, %26 : vector<8x1xf32>
    %28 = math.log %27 : vector<8x1xf32>
    %cst_10 = arith.constant 0.434294492 : f32
    %29 = vector.broadcast %cst_10 : f32 to vector<8x1xf32>
    %30 = arith.mulf %28, %29 : vector<8x1xf32>
    %cst_11 = arith.constant -1.000000e+01 : f32
    %31 = vector.broadcast %cst_11 : f32 to vector<8x1xf32>
    %32 = arith.mulf %31, %30 : vector<8x1xf32>
    %c0_12 = arith.constant 0 : index
    %c0_13 = arith.constant 0 : index
    %33 = vector.load %arg3[%c0_12, %c0_13] : memref<8x1xf32, #tpu.memory_space<vmem>>, vector<8x1xf32>
    tpu.vector_store %arg3[%c0_12, %c0_13], %32 {strides = array<i32>} : memref<8x1xf32, #tpu.memory_space<vmem>>, vector<8x1xf32>,
    return
  }
  func.func @transform_0(%arg0: i32) -> (i32, i32) {
    %c0_i32 = arith.constant 0 : i32
    %c0_i32_0 = arith.constant 0 : i32
    return %arg0, %c0_i32 : i32, i32
  }
  func.func @transform_1(%arg0: i32) -> (i32, i32) {
    %c0_i32 = arith.constant 0 : i32
    %c0_i32_0 = arith.constant 0 : i32
    return %arg0, %c0_i32 : i32, i32
  }
  func.func @transform_2(%arg0: i32) -> (i32, i32) {
    %c0_i32 = arith.constant 0 : i32
    %c0_i32_0 = arith.constant 0 : i32
    return %arg0, %c0_i32 : i32, i32
  }
}

</mosaic_0001>

<llo_original>
// kernel: tpu_custom_call.1
$region0: #{tpu_custom_call.1}
  #allocation0 [shape = 'u32[]', space=smem, size = 0x4, offset = 0x4, fixed_abs, tag = 'smem constant byte address 0x4 - core index']
  #allocation1 [shape = 'u32[72,128]{1,0:T(1,128)}', space=vmem, size = 0x9000, scoped, tag = 'internal scratch']
  %s0 = inlined_call_operand.hbm [shape: f32[8,128], index: 0, kind: input, shape index: {}]
  %s1 = inlined_call_operand.hbm [shape: f32[8,128], index: 1, kind: input, shape index: {}]
  %s2 = inlined_call_operand.vmem [shape: f32[8,1], index: 2, kind: output, shape index: {}]
  %s3 = sld [smem:[#allocation0]]
  $region26: #{tpu_custom_call.1} parent=0
    _
  %s5 = ssub.s32 1, %s3
  %s6 = scalar_select 0, %s5, %s3
  $region1: #{tpu_custom_call.1} parent=0
    #allocation2 [shape = 'u8[4096]{0}', space=vmem, size = 0x1000, scoped, tag = 'input window, operand 0, single buffered']
    #allocation3 [shape = 's32[1]{0}', space=sflag, size = 0x4, scoped, tag = 'scoped memory for tpu_custom_call.1']
    #allocation4 [shape = 'u8[4096]{0}', space=vmem, size = 0x1000, scoped, tag = 'input window, operand 1, single buffered']
    #allocation5 [shape = 's32[1]{0}', space=sflag, size = 0x4, scoped, tag = 'scoped memory for tpu_custom_call.1']
    %7 = vsyncpa [#allocation3], 0
    %8 = vsyncpa [#allocation5], 0
    // Predicated region
    $region2: #{tpu_custom_call.1} parent=1 // pred_check
      _
    $region3: #{tpu_custom_call.1} parent=1 // pred_check_branch
      %10 = sbr.rel (0) target = $region5
    $region4: #{tpu_custom_call.1} parent=1 // pred_region
      %12 = vsyncadd [#allocation3], 0
      %s14 = sshll.u32 %s0, 4
      %s15 = int_to_ptr.hbm [resolvable:$true] %s14
      %s16 = sshll.u32 [#allocation2], 4
      %s17 = int_to_ptr.vmem [resolvable:$true] %s16
      %19 = dma.hbm_to_vmem [thread:$0]  %s15, 128, %s17, [#allocation3]
    $region5: #{tpu_custom_call.1} parent=1 // pred_fallthru
      _
    // Predicated region
    $region6: #{tpu_custom_call.1} parent=1 // pred_check
      _
    $region7: #{tpu_custom_call.1} parent=1 // pred_check_branch
      %21 = sbr.rel (0) target = $region9
    $region8: #{tpu_custom_call.1} parent=1 // pred_region
      %23 = vsyncadd [#allocation5], 0
      %s25 = sshll.u32 %s1, 4
      %s26 = int_to_ptr.hbm [resolvable:$true] %s25
      %s27 = sshll.u32 [#allocation4], 4
      %s28 = int_to_ptr.vmem [resolvable:$true] %s27
      %30 = dma.hbm_to_vmem [thread:$0]  %s26, 128, %s28, [#allocation5]
    $region9: #{tpu_custom_call.1} parent=1 // pred_fallthru
      _
    // Predicated region
    $region10: #{tpu_custom_call.1} parent=1 // pred_check
      _
    $region11: #{tpu_custom_call.1} parent=1 // pred_check_branch
      %32 = sbr.rel (0) target = $region13
    $region12: #{tpu_custom_call.1} parent=1 // pred_region
      %34 = dma.done [#allocation3], 128
    $region13: #{tpu_custom_call.1} parent=1 // pred_fallthru
      _
    // Predicated region
    $region14: #{tpu_custom_call.1} parent=1 // pred_check
      _
    $region15: #{tpu_custom_call.1} parent=1 // pred_check_branch
      %36 = sbr.rel (0) target = $region17
    $region16: #{tpu_custom_call.1} parent=1 // pred_region
      %38 = dma.done [#allocation5], 128
    $region17: #{tpu_custom_call.1} parent=1 // pred_fallthru
      _
    %v39 = vld [vmem:[#allocation2] sm:$0xff]
    %v40 = vld [vmem:[#allocation4] sm:$0xff]
    %v41 = vmul.f32 %v39, %v40
    %42 = vadd.xlane.f32.xlu0 %v41
    %v43 = vpop.xlane.xlu0 %42
    %v44 = vmul.f32 %v40, %v40
    %45 = vadd.xlane.f32.xlu0 %v44
    %v46 = vpop.xlane.xlu0 %45
    %v47 = vmul.f32 %v39, %v39
    %48 = vadd.xlane.f32.xlu0 %v47
    %v49 = vpop.xlane.xlu0 %48
    %v50 = vadd.f32 %v46, 1e-12
    %v51 = vrcp.pop %v50
    %v52 = vmul.f32 %v50, %v51
    %v53 = vsub.f32 1.0, %v52
    %v54 = vmul.f32 %v51, %v53
    %v55 = vadd.f32 %v51, %v54
    %vm56 = vweird.f32 %v50
    %vm57 = vweird.f32 %v51
    %vm58 = vmor %vm56, %vm57
    %v59 = vsel %vm58, %v51, %v55
    %v60 = vand.u32 2147483647, %v50
    %vm61 = vcmp.eq.f32.partialorder %v60, 8.507059e+37
    %v62 = vand.u32 %v50, 2147483648
    %v63 = vor.u32 1.1754944e-38, %v62
    %v64 = vsel %vm61, %v63, %v59
    %v65 = vmul.f32 %v43, %v64
    %v66 = vmul.f32 %v65, %v65
    %v67 = vmul.f32 %v66, %v46
    %v68 = vmul.f32 %v65, 2.0
    %v69 = vmul.f32 %v68, %v43
    %v70 = vsub.f32 %v67, %v69
    %v71 = vadd.f32 %v70, %v49
    %v72 = vmax.f32 %v71, 0.0
    %v73 = vadd.f32 %v67, 1e-12
    %v74 = vadd.f32 %v72, 1e-12
    %v75 = vrcp.pop %v74
    %v76 = vmul.f32 %v74, %v75
    %v77 = vsub.f32 1.0, %v76
    %v78 = vmul.f32 %v75, %v77
    %v79 = vadd.f32 %v75, %v78
    %vm80 = vweird.f32 %v74
    %vm81 = vweird.f32 %v75
    %vm82 = vmor %vm80, %vm81
    %v83 = vsel %vm82, %v75, %v79
    %v84 = vand.u32 2147483647, %v74
    %vm85 = vcmp.eq.f32.partialorder %v84, 8.507059e+37
    %v86 = vand.u32 %v74, 2147483648
    %v87 = vor.u32 1.1754944e-38, %v86
    %v88 = vsel %vm85, %v87, %v83
    %v89 = vmul.f32 %v73, %v88
    %v90 = vlog2.pop %v89
    %v91 = vmul.f32 %v90, 0.6931472
    %v92 = vmul.f32 %v91, 0.4342945
    %v93 = vmul.f32 %v92, -10.0
    %vm94 = vcmask 7168
    %95 = vst.msk [vmem:[%s2] sm:$0xff] %vm94, %v93
    // Predicated region
    $region18: #{tpu_custom_call.1} parent=1 // pred_check
      _
    $region19: #{tpu_custom_call.1} parent=1 // pred_check_branch
      %97 = sbr.rel (0) target = $region21
    $region20: #{tpu_custom_call.1} parent=1 // pred_region
      _
    $region21: #{tpu_custom_call.1} parent=1 // pred_fallthru
      _
    // Predicated region
    $region22: #{tpu_custom_call.1} parent=1 // pred_check
      _
    $region23: #{tpu_custom_call.1} parent=1 // pred_check_branch
      %99 = sbr.rel (0) target = $region25
    $region24: #{tpu_custom_call.1} parent=1 // pred_region
      _
    $region25: #{tpu_custom_call.1} parent=1 // pred_fallthru
      _
    %100 = vsyncpa [#allocation3], 1
    %101 = vsyncpa [#allocation5], 1

</llo_original>
